<compile_context>
chip_gen: v5e
topology: v5e:2x2
jax: 0.10.0
libtpu: 0.0.40
codegen_flags: <defaults>
</compile_context>

<pallas_src>
import functools

import jax
import jax.numpy as jnp
from jax.experimental import pallas as pl
from jax.experimental.pallas import tpu as pltpu

LN_EPS = 1e-5


def _round_up(n, m):
    return ((n + m - 1) // m) * m


def ffn_kernel(x_ref, w1_ref, b1_ref, w2_ref, b2_ref, o_ref, *, swish_dtype):
    # x_ref: (tm, D) tile of input rows.
    x = x_ref[...].astype(jnp.float32)

    # --- LayerNorm over last dim (gamma/beta folded into w1/b1 offline) ---
    mean = jnp.mean(x, axis=-1, keepdims=True)
    xc = x - mean
    var = jnp.mean(xc * xc, axis=-1, keepdims=True)
    xn = xc * jax.lax.rsqrt(var + LN_EPS)

    # --- Linear1 (D -> H): bf16 operands, f32 MXU accumulation ---
    h = jnp.dot(xn.astype(w1_ref.dtype), w1_ref[...],
                preferred_element_type=jnp.float32)

    # --- Bias + Swish in swish_dtype (bf16 on v6e/v7x, f32 on v5e) ---
    h = h.astype(swish_dtype) + b1_ref[...].astype(swish_dtype)
    h = h * jax.nn.sigmoid(h)          # sigmoid -> EUP (free slot)
    # Dropout (p=0.1) is identity at inference.

    # --- Linear2 (H -> D): bf16 operands, f32 accumulation ---
    y = jnp.dot(h.astype(w2_ref.dtype), w2_ref[...],
                preferred_element_type=jnp.float32)
    y = y + b2_ref[...]
    # Dropout (p=0.1) is identity at inference.

    o_ref[...] = y.astype(o_ref.dtype)


def prepare_params(params, *, weight_dtype=jnp.bfloat16):
    """One-time weight preparation (call at weight-load time, NOT per forward).

    Folds the LayerNorm affine into Linear1 exactly (in f32):
      (xn*gamma + beta) @ W1 + b1 == xn @ (diag(gamma) @ W1) + (beta @ W1 + b1)
    and casts the matmul weights to `weight_dtype` once.
    Weights are stored (in, out) == transpose of nn.Linear's (out, in).
    """
    D, H = params["w1"].shape
    gamma = params["gamma"].reshape(1, D).astype(jnp.float32)
    beta = params["beta"].reshape(1, D).astype(jnp.float32)
    w1 = params["w1"].astype(jnp.float32)
    b1 = params["b1"].reshape(1, H).astype(jnp.float32)
    return {
        "w1": (gamma.reshape(D, 1) * w1).astype(weight_dtype),   # (D, H)
        "b1": beta @ w1 + b1,                                    # (1, H) f32
        "w2": params["w2"].astype(weight_dtype),                 # (H, D)
        "b2": params["b2"].reshape(1, D).astype(jnp.float32),    # (1, D) f32
    }


def feed_forward_module(x, prep, *, tm=256, swish_dtype=jnp.bfloat16):
    """x: (B, T, D) f32 or bf16.  prep: output of prepare_params().

    Output dtype matches x (bf16 activations halve DMA if the model uses them);
    LayerNorm statistics are always computed in f32 in-kernel.
    """
    B, T, D = x.shape
    H = prep["w1"].shape[1]
    rows = B * T
    x2d = x.reshape(rows, D)

    # Row tiling: big tiles amortize the ~0.35 us/grid-step overhead, but cap
    # the tile so there are >= 2 grid steps (keeps v7x's second TensorCore
    # busy).  Rows are NOT padded in HBM: Pallas handles the ragged last block
    # (OOB reads stay in their own independent rows, OOB writes are dropped).
    half = _round_up(pl.cdiv(rows, 2), 8)
    tm_eff = max(8, min(tm, half))
    grid = (pl.cdiv(rows, tm_eff),)

    w_bytes = jnp.dtype(prep["w1"].dtype).itemsize
    s_bytes = jnp.dtype(swish_dtype).itemsize
    x_bytes = jnp.dtype(x.dtype).itemsize

    # VMEM budget: weights single-buffered, x/out tiles double-buffered, plus
    # the (tm,H) intermediate (f32 matmul result + swish copy) and (tm,D) f32
    # second-matmul result.  +50% headroom, clamped to [16, 64] MiB.
    vmem_bytes = (
        2 * D * H * w_bytes + (H + D) * 4     # w1 + w2 (1 buffer) + biases
        + 2 * tm_eff * D * x_bytes            # x tile  (2 buffers)
        + 2 * tm_eff * D * x_bytes            # out tile (2 buffers)
        + tm_eff * H * (4 + s_bytes)          # h intermediate
        + tm_eff * D * 4                      # y intermediate
    )
    vmem_limit = int(min(max(int(vmem_bytes * 1.5), 16 << 20), 64 << 20))

    cost = pl.CostEstimate(
        flops=4 * rows * D * H,                              # two matmuls
        transcendentals=rows * H,                            # sigmoid
        bytes_accessed=(2 * rows * D * x_bytes               # x in + y out
                        + 2 * D * H * w_bytes                # w1 + w2
                        + (H + D) * 4),                      # biases
    )

    const = lambda i: (0, 0)   # weights: same block every grid step
    kernel = functools.partial(ffn_kernel, swish_dtype=swish_dtype)

    # TODO(synk): for very large dims (D>=1024, H>=4096) on v7x, switch to an
    # H-tiled reduction grid with a (tm, D) f32 accumulator scratch instead of
    # fully-resident weights.
    out = pl.pallas_call(
        kernel,
        out_shape=jax.ShapeDtypeStruct((rows, D), x.dtype),
        grid_spec=pltpu.PrefetchScalarGridSpec(
            num_scalar_prefetch=0,
            grid=grid,
            in_specs=[
                pl.BlockSpec((tm_eff, D), lambda i: (i, 0)),             # x tile
                pl.BlockSpec((D, H), const, pipeline_mode=pl.Buffered(1)),  # w1
                pl.BlockSpec((1, H), const, pipeline_mode=pl.Buffered(1)),  # b1
                pl.BlockSpec((H, D), const, pipeline_mode=pl.Buffered(1)),  # w2
                pl.BlockSpec((1, D), const, pipeline_mode=pl.Buffered(1)),  # b2
            ],
            out_specs=pl.BlockSpec((tm_eff, D), lambda i: (i, 0)),
        ),
        compiler_params=pltpu.CompilerParams(
            dimension_semantics=("parallel",),
            vmem_limit_bytes=vmem_limit,
        ),
        cost_estimate=cost,
    )(x2d, prep["w1"], prep["b1"], prep["w2"], prep["b2"])

    return out.reshape(B, T, D)


def init_params(key, encoder_dim, expansion_factor):
    D = encoder_dim
    H = encoder_dim * expansion_factor
    k1, k2, k3, k4, k5, k6 = jax.random.split(key, 6)
    return {
        # Non-trivial affine to exercise the gamma/beta folding path.
        "gamma": 1.0 + 0.1 * jax.random.normal(k5, (1, D), jnp.float32),
        "beta": 0.02 * jax.random.normal(k6, (1, D), jnp.float32),
        "w1": jax.random.normal(k1, (D, H), jnp.float32) * (1.0 / jnp.sqrt(D)),
        "b1": jax.random.normal(k2, (1, H), jnp.float32) * 0.01,
        "w2": jax.random.normal(k3, (H, D), jnp.float32) * (1.0 / jnp.sqrt(H)),
        "b2": jax.random.normal(k4, (1, D), jnp.float32) * 0.01,
    }


def reference(x, params):
    # Pure-JAX f32 reference (same math as the PyTorch module, eval mode).
    mean = jnp.mean(x, axis=-1, keepdims=True)
    var = jnp.mean((x - mean) ** 2, axis=-1, keepdims=True)
    xn = (x - mean) / jnp.sqrt(var + LN_EPS)
    xn = xn * params["gamma"][0] + params["beta"][0]
    h = xn @ params["w1"] + params["b1"][0]
    h = h * jax.nn.sigmoid(h)
    return h @ params["w2"] + params["b2"][0]


if __name__ == "__main__":
    # Small demo shapes (B, T, encoder_dim).  D is a multiple of 128 so the
    # output block is lane-dense; T=12 makes the last row-tile ragged, which
    # exercises the no-padding path.  (Production Conformer: D=512, H=2048.)
    B, T, D, EXP = 2, 12, 128, 4

    key = jax.random.PRNGKey(0)
    kx, kp = jax.random.split(key)
    x = jax.random.normal(kx, (B, T, D), jnp.float32)
    params = init_params(kp, D, EXP)

    # Weight folding / casting happens once, outside the forward path.
    prep = prepare_params(params)

    y = feed_forward_module(x, prep)
    y = jax.block_until_ready(y)

    y_ref = reference(x, params)
    assert y.shape == (B, T, D)
    assert bool(jnp.all(jnp.isfinite(y)))
    # bf16 matmul/Swish with f32 accumulation -> percent-level tolerance.
    abs_err = float(jnp.max(jnp.abs(y - y_ref)))
    scale = float(jnp.max(jnp.abs(y_ref)))
    assert abs_err < 5e-2 * scale + 1e-3, f"mismatch: abs_err={abs_err}, scale={scale}"

    print("KERNEL_OK")
</pallas_src>

<mosaic_0001>
module attributes {stable_mosaic.version = 11 : i64} {
  func.func @ffn_kernel(%arg0: i32, %arg1: memref<16x128xf32, #tpu.memory_space<vmem>>, %arg2: memref<128x512xbf16, #tpu.memory_space<vmem>>, %arg3: memref<1x512xf32, #tpu.memory_space<vmem>>, %arg4: memref<512x128xbf16, #tpu.memory_space<vmem>>, %arg5: memref<1x128xf32, #tpu.memory_space<vmem>>, %arg6: memref<16x128xf32, #tpu.memory_space<vmem>>) attributes {dimension_semantics = [#tpu.dimension_semantics<parallel>], iteration_bounds = array<i64: 2>, scalar_prefetch = 0 : i64, scratch_operands = 0 : i64, tpu.core_type = #tpu.core_type<tc>, window_params = [{transform_indices = @transform_0, window_bounds = array<i64: 16, 128>}, {pipeline_mode = #tpu.pipeline_mode<synchronous>, transform_indices = @transform_1, window_bounds = array<i64: 128, 512>}, {pipeline_mode = #tpu.pipeline_mode<synchronous>, transform_indices = @transform_2, window_bounds = array<i64: 1, 512>}, {pipeline_mode = #tpu.pipeline_mode<synchronous>, transform_indices = @transform_3, window_bounds = array<i64: 512, 128>}, {pipeline_mode = #tpu.pipeline_mode<synchronous>, transform_indices = @transform_4, window_bounds = array<i64: 1, 128>}, {transform_indices = @transform_5, window_bounds = array<i64: 16, 128>}]} {
    %c0 = arith.constant 0 : index
    %c0_0 = arith.constant 0 : index
    %0 = vector.load %arg1[%c0, %c0_0] : memref<16x128xf32, #tpu.memory_space<vmem>>, vector<16x128xf32>
    %cst = arith.constant dense<0.000000e+00> : vector<16xf32>
    %1 = vector.multi_reduction <add>, %0, %cst [1] : vector<16x128xf32> to vector<16xf32>
    %2 = vector.shape_cast %1 : vector<16xf32> to vector<16x1xf32>
    %cst_1 = arith.constant 1.280000e+02 : f32
    %3 = vector.broadcast %cst_1 : f32 to vector<16x1xf32>
    %4 = arith.divf %2, %3 : vector<16x1xf32>
    %5 = vector.broadcast %4 : vector<16x1xf32> to vector<16x128xf32>
    %6 = arith.subf %0, %5 : vector<16x128xf32>
    %7 = arith.mulf %6, %6 : vector<16x128xf32>
    %cst_2 = arith.constant dense<0.000000e+00> : vector<16xf32>
    %8 = vector.multi_reduction <add>, %7, %cst_2 [1] : vector<16x128xf32> to vector<16xf32>
    %9 = vector.shape_cast %8 : vector<16xf32> to vector<16x1xf32>
    %cst_3 = arith.constant 1.280000e+02 : f32
    %10 = vector.broadcast %cst_3 : f32 to vector<16x1xf32>
    %11 = arith.divf %9, %10 : vector<16x1xf32>
    %cst_4 = arith.constant 9.99999974E-6 : f32
    %12 = vector.broadcast %cst_4 : f32 to vector<16x1xf32>
    %13 = arith.addf %11, %12 : vector<16x1xf32>
    %14 = math.rsqrt %13 : vector<16x1xf32>
    %15 = vector.broadcast %14 : vector<16x1xf32> to vector<16x128xf32>
    %16 = arith.mulf %6, %15 : vector<16x128xf32>
    %17 = arith.truncf %16 : vector<16x128xf32> to vector<16x128xbf16>
    %c0_5 = arith.constant 0 : index
    %c0_6 = arith.constant 0 : index
    %18 = vector.load %arg2[%c0_5, %c0_6] : memref<128x512xbf16, #tpu.memory_space<vmem>>, vector<128x512xbf16>
    %cst_7 = arith.constant dense<0.000000e+00> : vector<16x512xf32>
    %19 = tpu.matmul %17, %18, %cst_7 {dimension_numbers = #tpu.dot_dimension_numbers<[1], [0], [0], [1], [0, 0, 1, 1], [], []>} : vector<16x128xbf16>, vector<128x512xbf16>, vector<16x512xf32> -> vector<16x512xf32>
    %20 = arith.truncf %19 : vector<16x512xf32> to vector<16x512xbf16>
    %c0_8 = arith.constant 0 : index
    %c0_9 = arith.constant 0 : index
    %21 = vector.load %arg3[%c0_8, %c0_9] : memref<1x512xf32, #tpu.memory_space<vmem>>, vector<1x512xf32>
    %22 = arith.truncf %21 : vector<1x512xf32> to vector<1x512xbf16>
    %23 = vector.broadcast %22 : vector<1x512xbf16> to vector<16x512xbf16>
    %24 = arith.addf %20, %23 : vector<16x512xbf16>
    %25 = arith.negf %24 : vector<16x512xbf16>
    %26 = math.exp %25 : vector<16x512xbf16>
    %cst_10 = arith.constant 1.000000e+00 : bf16
    %27 = vector.broadcast %cst_10 : bf16 to vector<16x512xbf16>
    %28 = arith.addf %27, %26 : vector<16x512xbf16>
    %29 = arith.divf %27, %28 : vector<16x512xbf16>
    %30 = arith.mulf %24, %29 : vector<16x512xbf16>
    %c0_11 = arith.constant 0 : index
    %c0_12 = arith.constant 0 : index
    %31 = vector.load %arg4[%c0_11, %c0_12] : memref<512x128xbf16, #tpu.memory_space<vmem>>, vector<512x128xbf16>
    %cst_13 = arith.constant dense<0.000000e+00> : vector<16x128xf32>
    %32 = tpu.matmul %30, %31, %cst_13 {dimension_numbers = #tpu.dot_dimension_numbers<[1], [0], [0], [1], [0, 0, 1, 1], [], []>} : vector<16x512xbf16>, vector<512x128xbf16>, vector<16x128xf32> -> vector<16x128xf32>
    %c0_14 = arith.constant 0 : index
    %c0_15 = arith.constant 0 : index
    %33 = vector.load %arg5[%c0_14, %c0_15] : memref<1x128xf32, #tpu.memory_space<vmem>>, vector<1x128xf32>
    %34 = vector.broadcast %33 : vector<1x128xf32> to vector<16x128xf32>
    %35 = arith.addf %32, %34 : vector<16x128xf32>
    %c0_16 = arith.constant 0 : index
    %c0_17 = arith.constant 0 : index
    %36 = vector.load %arg6[%c0_16, %c0_17] : memref<16x128xf32, #tpu.memory_space<vmem>>, vector<16x128xf32>
    tpu.vector_store %arg6[%c0_16, %c0_17], %35 {strides = array<i32>} : memref<16x128xf32, #tpu.memory_space<vmem>>, vector<16x128xf32>,
    return
  }
  func.func @transform_0(%arg0: i32) -> (i32, i32) {
    %c0_i32 = arith.constant 0 : i32
    %c0_i32_0 = arith.constant 0 : i32
    return %arg0, %c0_i32 : i32, i32
  }
  func.func @transform_1(%arg0: i32) -> (i32, i32) {
    %c0_i32 = arith.constant 0 : i32
    %c0_i32_0 = arith.constant 0 : i32
    %c0_i32_1 = arith.constant 0 : i32
    return %c0_i32, %c0_i32_0 : i32, i32
  }
  func.func @transform_2(%arg0: i32) -> (i32, i32) {
    %c0_i32 = arith.constant 0 : i32
    %c0_i32_0 = arith.constant 0 : i32
    %c0_i32_1 = arith.constant 0 : i32
    return %c0_i32, %c0_i32_0 : i32, i32
  }
  func.func @transform_3(%arg0: i32) -> (i32, i32) {
    %c0_i32 = arith.constant 0 : i32
    %c0_i32_0 = arith.constant 0 : i32
    %c0_i32_1 = arith.constant 0 : i32
    return %c0_i32, %c0_i32_0 : i32, i32
  }
  func.func @transform_4(%arg0: i32) -> (i32, i32) {
    %c0_i32 = arith.constant 0 : i32
    %c0_i32_0 = arith.constant 0 : i32
    %c0_i32_1 = arith.constant 0 : i32
    return %c0_i32, %c0_i32_0 : i32, i32
  }
  func.func @transform_5(%arg0: i32) -> (i32, i32) {
    %c0_i32 = arith.constant 0 : i32
    %c0_i32_0 = arith.constant 0 : i32
    return %arg0, %c0_i32 : i32, i32
  }
}

</mosaic_0001>

<llo_original>
// kernel: tpu_custom_call.1
$region0: #{tpu_custom_call.1}
  #allocation0 [shape = 'u32[]', space=smem, size = 0x4, offset = 0x4, fixed_abs, tag = 'smem constant byte address 0x4 - core index']
  #allocation1 [shape = 'u32[72,128]{1,0:T(1,128)}', space=vmem, size = 0x9000, scoped, tag = 'internal scratch']
  %s0 = inlined_call_operand.hbm [shape: f32[24,128], index: 0, kind: input, shape index: {}]
  %s1 = inlined_call_operand.hbm [shape: bf16[128,512], index: 1, kind: input, shape index: {}]
  %s2 = inlined_call_operand.hbm [shape: f32[1,512], index: 2, kind: input, shape index: {}]
  %s3 = inlined_call_operand.hbm [shape: bf16[512,128], index: 3, kind: input, shape index: {}]
  %s4 = inlined_call_operand.vmem [shape: f32[1,128], index: 4, kind: input, shape index: {}]
  %s5 = inlined_call_operand.hbm [shape: f32[24,128], index: 5, kind: output, shape index: {}]
  %s6 = sld [smem:[#allocation0]]
  $region69: #{tpu_custom_call.1} parent=0
    _
  %s8 = ssub.s32 1, %s6
  %s9 = scalar_select 0, %s8, %s6
  $region1: #{tpu_custom_call.1} parent=0
    #allocation2 [shape = 'u8[16384]{0}', space=vmem, size = 0x4000, scoped, tag = 'input window, operand 0']
    #allocation3 [shape = 's32[2]{0}', space=sflag, size = 0x8, scoped, tag = 'scoped memory for tpu_custom_call.1']
    #allocation4 [shape = 's32[2]{0}', space=sflag, size = 0x8, scoped, tag = 'scoped memory for tpu_custom_call.1']
    #allocation5 [shape = 'u8[131072]{0}', space=vmem, size = 0x20000, scoped, tag = 'input window, operand 1, single buffered']
    #allocation6 [shape = 's32[1]{0}', space=sflag, size = 0x4, scoped, tag = 'scoped memory for tpu_custom_call.1']
    #allocation7 [shape = 'u8[2048]{0}', space=vmem, size = 0x800, scoped, tag = 'input window, operand 2, single buffered']
    #allocation8 [shape = 'u8[131072]{0}', space=vmem, size = 0x20000, scoped, tag = 'input window, operand 3, single buffered']
    #allocation9 [shape = 's32[1]{0}', space=sflag, size = 0x4, scoped, tag = 'scoped memory for tpu_custom_call.1']
    #allocation10 [shape = 'u8[16384]{0}', space=vmem, size = 0x4000, scoped, tag = 'output window, operand 0']
    %10 = vsyncpa [#allocation3], 0
    %s11 = scalar_lea.sflag [#allocation3], 1
    %12 = vsyncpa %s11, 0
    %13 = vsyncpa [#allocation6], 0
    %14 = vsyncpa [#allocation9], 0
    %15 = vsyncpa [#allocation4], 0
    %s16 = scalar_lea.sflag [#allocation4], 1
    %17 = vsyncpa %s16, 0
    loop: start=0, step=1, limit=4
    $region2: #{tpu_custom_call.1} parent=1 // loop_pre_header
      _
    $region3: #{tpu_custom_call.1} parent=1 // loop_header
      %s19 = sphi 0, %s23
      %p20 = scmp.ge.s32.totalorder %s19, 4
      %s29 = sphi 0, %s31
      %s32 = sphi 0, %s29
      %s33 = sphi 0, %s32
      %s49 = sphi 0, %s33
      %s53 = sphi 0, %s53
      %s55 = sphi 0, %s53
      %s56 = sphi 0, %s55
      %s70 = sphi 0, %s56
      %s74 = sphi 0, %s74
      %s76 = sphi 0, %s74
      %s77 = sphi 0, %s76
      %s91 = sphi 0, %s77
      %s95 = sphi 0, %s95
      %s97 = sphi 0, %s95
      %s98 = sphi 0, %s97
      %s112 = sphi 0, %s98
      %s116 = sphi 0, %s116
      %s118 = sphi 0, %s116
      %s119 = sphi 0, %s118
      %s133 = sphi 0, %s119
      %s139 = sphi 0, %s141
      %s142 = sphi 0, %s139
      %s143 = sphi 0, %s142
      %s159 = sphi 0, %s143
    $region4: #{tpu_custom_call.1} parent=1 // loop_header_branch
      %22 = sbr.rel (%p20) target = $region8
    $region5: #{tpu_custom_call.1} parent=1 // loop_body
      %s24 = ssub.s32 %s19, 1
      %s25 = ssub.s32 %s19, 2
      %s26 = sadd.s32 %s19, 1
      %s27 = ssub.s32 %s19, %s26
      %p28 = scmp.eq.s32.totalorder %s27, 0
      %s30 = sadd.s32 %s29, 1
      %s31 = scalar_select %p28, %s29, %s30
      %p34 = pneg %p28
      %p35 = scmp.eq.s32.totalorder %s19, 1
      %p36 = por %p34, %p35
      %p37 = scmp.ne.s32.totalorder %s29, %s32
      %p38 = scmp.eq.s32.totalorder %s19, 0
      %p39 = por %p37, %p38
      %p40 = scmp.ne.s32.totalorder %s29, %s32
      %p41 = scmp.eq.s32.totalorder %s24, 1
      %p42 = por %p40, %p41
      %p43 = scmp.ne.s32.totalorder %s32, %s33
      %p44 = scmp.eq.s32.totalorder %s24, 0
      %p45 = por %p43, %p44
      %p46 = scmp.ne.s32.totalorder %s32, %s33
      %p47 = scmp.eq.s32.totalorder %s25, 1
      %p48 = por %p46, %p47
      %p50 = scmp.ne.s32.totalorder %s33, %s49
      %p51 = scmp.eq.s32.totalorder %s25, 0
      %p52 = por %p50, %p51
      %s54 = sadd.s32 %s53, 1
      %p57 = scmp.eq.s32.totalorder %s19, 1
      %p58 = scmp.ne.s32.totalorder %s53, %s55
      %p59 = scmp.eq.s32.totalorder %s19, 0
      %p60 = por %p58, %p59
      %p61 = scmp.ne.s32.totalorder %s53, %s55
      %p62 = scmp.eq.s32.totalorder %s24, 1
      %p63 = por %p61, %p62
      %p64 = scmp.ne.s32.totalorder %s55, %s56
      %p65 = scmp.eq.s32.totalorder %s24, 0
      %p66 = por %p64, %p65
      %p67 = scmp.ne.s32.totalorder %s55, %s56
      %p68 = scmp.eq.s32.totalorder %s25, 1
      %p69 = por %p67, %p68
      %p71 = scmp.ne.s32.totalorder %s56, %s70
      %p72 = scmp.eq.s32.totalorder %s25, 0
      %p73 = por %p71, %p72
      %s75 = sadd.s32 %s74, 1
      %p78 = scmp.eq.s32.totalorder %s19, 1
      %p79 = scmp.ne.s32.totalorder %s74, %s76
      %p80 = scmp.eq.s32.totalorder %s19, 0
      %p81 = por %p79, %p80
      %p82 = scmp.ne.s32.totalorder %s74, %s76
      %p83 = scmp.eq.s32.totalorder %s24, 1
      %p84 = por %p82, %p83
      %p85 = scmp.ne.s32.totalorder %s76, %s77
      %p86 = scmp.eq.s32.totalorder %s24, 0
      %p87 = por %p85, %p86
      %p88 = scmp.ne.s32.totalorder %s76, %s77
      %p89 = scmp.eq.s32.totalorder %s25, 1
      %p90 = por %p88, %p89
      %p92 = scmp.ne.s32.totalorder %s77, %s91
      %p93 = scmp.eq.s32.totalorder %s25, 0
      %p94 = por %p92, %p93
      %s96 = sadd.s32 %s95, 1
      %p99 = scmp.eq.s32.totalorder %s19, 1
      %p100 = scmp.ne.s32.totalorder %s95, %s97
      %p101 = scmp.eq.s32.totalorder %s19, 0
      %p102 = por %p100, %p101
      %p103 = scmp.ne.s32.totalorder %s95, %s97
      %p104 = scmp.eq.s32.totalorder %s24, 1
      %p105 = por %p103, %p104
      %p106 = scmp.ne.s32.totalorder %s97, %s98
      %p107 = scmp.eq.s32.totalorder %s24, 0
      %p108 = por %p106, %p107
      %p109 = scmp.ne.s32.totalorder %s97, %s98
      %p110 = scmp.eq.s32.totalorder %s25, 1
      %p111 = por %p109, %p110
      %p113 = scmp.ne.s32.totalorder %s98, %s112
      %p114 = scmp.eq.s32.totalorder %s25, 0
      %p115 = por %p113, %p114
      %s117 = sadd.s32 %s116, 1
      %p120 = scmp.eq.s32.totalorder %s19, 1
      %p121 = scmp.ne.s32.totalorder %s116, %s118
      %p122 = scmp.eq.s32.totalorder %s19, 0
      %p123 = por %p121, %p122
      %p124 = scmp.ne.s32.totalorder %s116, %s118
      %p125 = scmp.eq.s32.totalorder %s24, 1
      %p126 = por %p124, %p125
      %p127 = scmp.ne.s32.totalorder %s118, %s119
      %p128 = scmp.eq.s32.totalorder %s24, 0
      %p129 = por %p127, %p128
      %p130 = scmp.ne.s32.totalorder %s118, %s119
      %p131 = scmp.eq.s32.totalorder %s25, 1
      %p132 = por %p130, %p131
      %p134 = scmp.ne.s32.totalorder %s119, %s133
      %p135 = scmp.eq.s32.totalorder %s25, 0
      %p136 = por %p134, %p135
      %s137 = ssub.s32 %s19, %s26
      %p138 = scmp.eq.s32.totalorder %s137, 0
      %s140 = sadd.s32 %s139, 1
      %s141 = scalar_select %p138, %s139, %s140
      %p144 = pneg %p138
      %p145 = scmp.eq.s32.totalorder %s19, 1
      %p146 = por %p144, %p145
      %p147 = scmp.ne.s32.totalorder %s139, %s142
      %p148 = scmp.eq.s32.totalorder %s19, 0
      %p149 = por %p147, %p148
      %p150 = scmp.ne.s32.totalorder %s139, %s142
      %p151 = scmp.eq.s32.totalorder %s24, 1
      %p152 = por %p150, %p151
      %p153 = scmp.ne.s32.totalorder %s142, %s143
      %p154 = scmp.eq.s32.totalorder %s24, 0
      %p155 = por %p153, %p154
      %p156 = scmp.ne.s32.totalorder %s142, %s143
      %p157 = scmp.eq.s32.totalorder %s25, 1
      %p158 = por %p156, %p157
      %p160 = scmp.ne.s32.totalorder %s143, %s159
      %p161 = scmp.eq.s32.totalorder %s25, 0
      %p162 = por %p160, %p161
      %p163 = scmp.le.s32.totalorder 1, %s19
      %p164 = scmp.lt.s32.totalorder %s19, 3
      %p165 = pnand %p163, %p164
      %p166 = pneg %p165
      // Predicated region
      $region9: #{tpu_custom_call.1} parent=5 // pred_check
        _
      $region10: #{tpu_custom_call.1} parent=5 // pred_check_branch
        %168 = sbr.rel (%p165) target = $region12
      $region11: #{tpu_custom_call.1} parent=5 // pred_region
        %s169 = ssub.s32 %s19, 1
        // Predicated region
        $region13: #{tpu_custom_call.1} parent=11 // pred_check
          %p170 = pneg %p66
        $region14: #{tpu_custom_call.1} parent=11 // pred_check_branch
          %172 = sbr.rel (%p170) target = $region16
        $region15: #{tpu_custom_call.1} parent=11 // pred_region
          %174 = vsyncadd [#allocation6], 0
          %s175 = sshll.u32 %s1, 4
          %s176 = int_to_ptr.hbm [resolvable:$true] %s175
          %s177 = sshll.u32 [#allocation5], 4
          %s178 = int_to_ptr.vmem [resolvable:$true] %s177
          %183 = dma.hbm_to_vmem [thread:$0]  %s176, 4096, %s178, [#allocation6], 256, 256, 16
        $region16: #{tpu_custom_call.1} parent=11 // pred_fallthru
          _
        // Predicated region
        $region17: #{tpu_custom_call.1} parent=11 // pred_check
          %p184 = pneg %p87
        $region18: #{tpu_custom_call.1} parent=11 // pred_check_branch
          %186 = sbr.rel (%p184) target = $region20
        $region19: #{tpu_custom_call.1} parent=11 // pred_region
          %188 = vsyncadd [#allocation6], 0
          %s190 = sshll.u32 %s2, 4
          %s191 = int_to_ptr.hbm [resolvable:$true] %s190
          %s192 = sshll.u32 [#allocation7], 4
          %s193 = int_to_ptr.vmem [resolvable:$true] %s192
          %195 = dma.hbm_to_vmem [thread:$0]  %s191, 64, %s193, [#allocation6]
        $region20: #{tpu_custom_call.1} parent=11 // pred_fallthru
          _
        // Predicated region
        $region21: #{tpu_custom_call.1} parent=11 // pred_check
          %p196 = pneg %p108
        $region22: #{tpu_custom_call.1} parent=11 // pred_check_branch
          %198 = sbr.rel (%p196) target = $region24
        $region23: #{tpu_custom_call.1} parent=11 // pred_region
          %200 = vsyncadd [#allocation9], 0
          %s201 = sshll.u32 %s3, 4
          %s202 = int_to_ptr.hbm [resolvable:$true] %s201
          %s203 = sshll.u32 [#allocation8], 4
          %s204 = int_to_ptr.vmem [resolvable:$true] %s203
          %209 = dma.hbm_to_vmem [thread:$0]  %s202, 4096, %s204, [#allocation9], 64, 64, 4
        $region24: #{tpu_custom_call.1} parent=11 // pred_fallthru
          _
        // Predicated region
        $region25: #{tpu_custom_call.1} parent=11 // pred_check
          %p210 = pneg %p129
        $region26: #{tpu_custom_call.1} parent=11 // pred_check_branch
          %212 = sbr.rel (%p210) target = $region28
        $region27: #{tpu_custom_call.1} parent=11 // pred_region
          _
        $region28: #{tpu_custom_call.1} parent=11 // pred_fallthru
          _
      $region12: #{tpu_custom_call.1} parent=5 // pred_fallthru
        _
      %p213 = scmp.lt.s32.totalorder %s19, 2
      // Predicated region
      $region29: #{tpu_custom_call.1} parent=5 // pred_check
        %p214 = pneg %p213
      $region30: #{tpu_custom_call.1} parent=5 // pred_check_branch
        %216 = sbr.rel (%p214) target = $region32
      $region31: #{tpu_custom_call.1} parent=5 // pred_region
        // Predicated region
        $region33: #{tpu_custom_call.1} parent=31 // pred_check
          %p217 = pneg %p39
        $region34: #{tpu_custom_call.1} parent=31 // pred_check_branch
          %219 = sbr.rel (%p217) target = $region36
        $region35: #{tpu_custom_call.1} parent=31 // pred_region
          %s220 = sand.u32 %s29, 1
          %s221 = scalar_lea.sflag [#allocation3], %s220
          %s222 = sand.u32 %s29, 1
          %s223 = smul.addr %s222, 16
          %s224 = scalar_lea.vmem [#allocation2], %s223
          %s225 = smul.u32 2, %s19
          %s226 = ssub.s32 3, %s225
          %p227 = scmp.lt.s32.totalorder %s226, 2
          %s228 = scalar_select %p227, %s226, 2
          %s229 = smul.u32 8, %s228
          %s230 = ssub.s32 16, %s229
          %s231 = sshll.u32 %s230, 4
          %232 = vsyncadd %s221, %s231
          %p233 = scmp.ne.s32.totalorder 0, %s229
          %s234 = smul.addr %s225, 8
          %s235 = scalar_lea.hbm %s0, %s234
          %s236 = smul.u32 8, %s228
          %s237 = sshll.u32 %s235, 4
          %s238 = int_to_ptr.hbm [resolvable:$true] %s237
          %s239 = sshll.u32 %s224, 4
          %s240 = int_to_ptr.vmem [resolvable:$true] %s239
          %s241 = sshll.u32 %s236, 4
          %245 = dma.hbm_to_vmem [thread:$0]  (%p233), %s238, %s241, %s240, %s221, 128, 128, 8
        $region36: #{tpu_custom_call.1} parent=31 // pred_fallthru
          _
      $region32: #{tpu_custom_call.1} parent=5 // pred_fallthru
        _
      %p246 = scmp.le.s32.totalorder 1, %s19
      %p247 = scmp.lt.s32.totalorder %s19, 3
      %p248 = pnand %p246, %p247
      %p249 = pneg %p248
      // Predicated region
      $region37: #{tpu_custom_call.1} parent=5 // pred_check
        _
      $region38: #{tpu_custom_call.1} parent=5 // pred_check_branch
        %251 = sbr.rel (%p248) target = $region40
      $region39: #{tpu_custom_call.1} parent=5 // pred_region
        %s252 = ssub.s32 %s19, 1
        %s253 = sand.u32 %s32, 1
        %s254 = scalar_lea.sflag [#allocation3], %s253
        %s255 = sand.u32 %s32, 1
        %s256 = smul.addr %s255, 16
        %s257 = scalar_lea.vmem [#allocation2], %s256
        // Predicated region
        $region41: #{tpu_custom_call.1} parent=39 // pred_check
          %p258 = pneg %p45
        $region42: #{tpu_custom_call.1} parent=39 // pred_check_branch
          %260 = sbr.rel (%p258) target = $region44
        $region43: #{tpu_custom_call.1} parent=39 // pred_region
          %262 = dma.done %s254, 256
        $region44: #{tpu_custom_call.1} parent=39 // pred_fallthru
          _
        // Predicated region
        $region45: #{tpu_custom_call.1} parent=39 // pred_check
          %p263 = pneg %p66
        $region46: #{tpu_custom_call.1} parent=39 // pred_check_branch
          %265 = sbr.rel (%p263) target = $region48
        $region47: #{tpu_custom_call.1} parent=39 // pred_region
          %267 = dma.done [#allocation6], 4096
        $region48: #{tpu_custom_call.1} parent=39 // pred_fallthru
          _
        // Predicated region
        $region49: #{tpu_custom_call.1} parent=39 // pred_check
          %p268 = pneg %p87
        $region50: #{tpu_custom_call.1} parent=39 // pred_check_branch
          %270 = sbr.rel (%p268) target = $region52
        $region51: #{tpu_custom_call.1} parent=39 // pred_region
          %272 = dma.done [#allocation6], 64
        $region52: #{tpu_custom_call.1} parent=39 // pred_fallthru
          _
        // Predicated region
        $region53: #{tpu_custom_call.1} parent=39 // pred_check
          %p273 = pneg %p108
        $region54: #{tpu_custom_call.1} parent=39 // pred_check_branch
          %275 = sbr.rel (%p273) target = $region56
        $region55: #{tpu_custom_call.1} parent=39 // pred_region
          %277 = dma.done [#allocation9], 4096
        $region56: #{tpu_custom_call.1} parent=39 // pred_fallthru
          _
        %s278 = sand.u32 %s32, 1
        %s279 = scalar_lea.sflag [#allocation3], %s278
        %s280 = sand.u32 %s32, 1
        %s281 = smul.addr %s280, 16
        %s282 = scalar_lea.vmem [#allocation2], %s281
        %p283 = pneg %p45
        %p284 = pneg %p42
        %p285 = pneg %p66
        %p286 = pneg %p63
        %p287 = pneg %p87
        %p288 = pneg %p84
        %p289 = pneg %p108
        %p290 = pneg %p105
        %p291 = pneg %p129
        %p292 = pneg %p126
        %p293 = pneg %p155
        %p294 = pneg %p152
        %s295 = sand.u32 %s142, 1
        %s296 = scalar_lea.sflag [#allocation4], %s295
        %s297 = sand.u32 %s142, 1
        %s298 = smul.addr %s297, 16
        %s299 = scalar_lea.vmem [#allocation10], %s298
        %s300 = smul.u32 2, %s24
        %s301 = ssub.s32 3, %s300
        %p302 = scmp.lt.s32.totalorder %s301, 2
        %s303 = scalar_select %p302, %s301, 2
        %s304 = smul.u32 8, %s303
        %s305 = smul.u32 2, %s24
        %s306 = ssub.s32 3, %s305
        %p307 = scmp.lt.s32.totalorder %s306, 2
        %s308 = scalar_select %p307, %s306, 2
        %s309 = smul.u32 8, %s308
        %v311 = vld [vmem:[%s257] sm:$0xff]
        %v312 = vld [vmem:[%s257 + $0x8] sm:$0xff]
        %313 = vadd.xlane.f32.xlu0 %v311
        %v314 = vpop.xlane.xlu0 %313
        %315 = vadd.xlane.f32.xlu0 %v312
        %v316 = vpop.xlane.xlu0 %315
        %v317 = vrcp.pop 128.0
        %v318 = vmul.f32 128.0, %v317
        %v319 = vsub.f32 1.0, %v318
        %v320 = vmul.f32 %v317, %v319
        %v321 = vadd.f32 %v317, %v320
        %vm322 = vweird.f32 %v317
        %v323 = vsel %vm322, %v317, %v321
        %v324 = vmul.f32 %v314, %v323
        %v325 = vmul.f32 %v316, %v323
        %v326 = vsub.f32 %v311, %v324
        %v327 = vsub.f32 %v312, %v325
        %v328 = vmul.f32 %v326, %v326
        %v329 = vmul.f32 %v327, %v327
        %330 = vadd.xlane.f32.xlu0 %v328
        %v331 = vpop.xlane.xlu0 %330
        %332 = vadd.xlane.f32.xlu0 %v329
        %v333 = vpop.xlane.xlu0 %332
        %v334 = vmul.f32 %v331, %v323
        %v335 = vmul.f32 %v333, %v323
        %v336 = vadd.f32 %v334, 1e-05
        %v337 = vadd.f32 %v335, 1e-05
        %v338 = vrsqrt.pop %v336
        %v339 = vmul.f32 %v338, %v336
        %v340 = vmul.f32 %v339, %v338
        %v341 = vmul.f32 0.5, %v340
        %v342 = vsub.f32 1.5, %v341
        %v343 = vmul.f32 %v338, %v342
        %vm344 = vweird.f32 %v336
        %vm345 = vweird.f32 %v338
        %vm346 = vmor %vm344, %vm345
        %v347 = vsel %vm346, %v338, %v343
        %v348 = vrsqrt.pop %v337
        %v349 = vmul.f32 %v348, %v337
        %v350 = vmul.f32 %v349, %v348
        %v351 = vmul.f32 0.5, %v350
        %v352 = vsub.f32 1.5, %v351
        %v353 = vmul.f32 %v348, %v352
        %vm354 = vweird.f32 %v337
        %vm355 = vweird.f32 %v348
        %vm356 = vmor %vm354, %vm355
        %v357 = vsel %vm356, %v348, %v353
        %v358 = vmul.f32 %v326, %v347
        %v359 = vmul.f32 %v327, %v357
        %v360 = vpack.c.bf16 %v359, %v358
        %v361 = vld [vmem:[#allocation5] sm:$0xff]
        %v362 = vld [vmem:[#allocation5 + $0x8] sm:$0xff]
        %v363 = vld [vmem:[#allocation5 + $0x10] sm:$0xff]
        %v364 = vld [vmem:[#allocation5 + $0x18] sm:$0xff]
        %v365 = vld [vmem:[#allocation5 + $0x20] sm:$0xff]
        %v366 = vld [vmem:[#allocation5 + $0x28] sm:$0xff]
        %v367 = vld [vmem:[#allocation5 + $0x30] sm:$0xff]
        %v368 = vld [vmem:[#allocation5 + $0x38] sm:$0xff]
        %v369 = vld [vmem:[#allocation5 + $0x40] sm:$0xff]
        %v370 = vld [vmem:[#allocation5 + $0x48] sm:$0xff]
        %v371 = vld [vmem:[#allocation5 + $0x50] sm:$0xff]
        %v372 = vld [vmem:[#allocation5 + $0x58] sm:$0xff]
        %v373 = vld [vmem:[#allocation5 + $0x60] sm:$0xff]
        %v374 = vld [vmem:[#allocation5 + $0x68] sm:$0xff]
        %v375 = vld [vmem:[#allocation5 + $0x70] sm:$0xff]
        %v376 = vld [vmem:[#allocation5 + $0x78] sm:$0xff]
        %v377 = vld [vmem:[#allocation5 + $0x80] sm:$0xff]
        %v378 = vld [vmem:[#allocation5 + $0x88] sm:$0xff]
        %v379 = vld [vmem:[#allocation5 + $0x90] sm:$0xff]
        %v380 = vld [vmem:[#allocation5 + $0x98] sm:$0xff]
        %v381 = vld [vmem:[#allocation5 + $0xa0] sm:$0xff]
        %v382 = vld [vmem:[#allocation5 + $0xa8] sm:$0xff]
        %v383 = vld [vmem:[#allocation5 + $0xb0] sm:$0xff]
        %v384 = vld [vmem:[#allocation5 + $0xb8] sm:$0xff]
        %v385 = vld [vmem:[#allocation5 + $0xc0] sm:$0xff]
        %v386 = vld [vmem:[#allocation5 + $0xc8] sm:$0xff]
        %v387 = vld [vmem:[#allocation5 + $0xd0] sm:$0xff]
        %v388 = vld [vmem:[#allocation5 + $0xd8] sm:$0xff]
        %v389 = vld [vmem:[#allocation5 + $0xe0] sm:$0xff]
        %v390 = vld [vmem:[#allocation5 + $0xe8] sm:$0xff]
        %v391 = vld [vmem:[#allocation5 + $0xf0] sm:$0xff]
        %v392 = vld [vmem:[#allocation5 + $0xf8] sm:$0xff]
        %v425 = vunpack.c.l.b16 %v361
        %v426 = vunpack.c.h.b16 %v361
        %v427 = vunpack.c.l.b16 %v362
        %v428 = vunpack.c.h.b16 %v362
        %v429 = vunpack.c.l.b16 %v363
        %v430 = vunpack.c.h.b16 %v363
        %v431 = vunpack.c.l.b16 %v364
        %v432 = vunpack.c.h.b16 %v364
        %v433 = vunpack.c.l.b16 %v365
        %v434 = vunpack.c.h.b16 %v365
        %v435 = vunpack.c.l.b16 %v366
        %v436 = vunpack.c.h.b16 %v366
        %v437 = vunpack.c.l.b16 %v367
        %v438 = vunpack.c.h.b16 %v367
        %v439 = vunpack.c.l.b16 %v368
        %v440 = vunpack.c.h.b16 %v368
        %v441 = vunpack.c.l.b16 %v369
        %v442 = vunpack.c.h.b16 %v369
        %v443 = vunpack.c.l.b16 %v370
        %v444 = vunpack.c.h.b16 %v370
        %v445 = vunpack.c.l.b16 %v371
        %v446 = vunpack.c.h.b16 %v371
        %v447 = vunpack.c.l.b16 %v372
        %v448 = vunpack.c.h.b16 %v372
        %v449 = vunpack.c.l.b16 %v373
        %v450 = vunpack.c.h.b16 %v373
        %v451 = vunpack.c.l.b16 %v374
        %v452 = vunpack.c.h.b16 %v374
        %v453 = vunpack.c.l.b16 %v375
        %v454 = vunpack.c.h.b16 %v375
        %v455 = vunpack.c.l.b16 %v376
        %v456 = vunpack.c.h.b16 %v376
        %v457 = vunpack.c.l.b16 %v377
        %v458 = vunpack.c.h.b16 %v377
        %v459 = vunpack.c.l.b16 %v378
        %v460 = vunpack.c.h.b16 %v378
        %v461 = vunpack.c.l.b16 %v379
        %v462 = vunpack.c.h.b16 %v379
        %v463 = vunpack.c.l.b16 %v380
        %v464 = vunpack.c.h.b16 %v380
        %v465 = vunpack.c.l.b16 %v381
        %v466 = vunpack.c.h.b16 %v381
        %v467 = vunpack.c.l.b16 %v382
        %v468 = vunpack.c.h.b16 %v382
        %v469 = vunpack.c.l.b16 %v383
        %v470 = vunpack.c.h.b16 %v383
        %v471 = vunpack.c.l.b16 %v384
        %v472 = vunpack.c.h.b16 %v384
        %v473 = vunpack.c.l.b16 %v385
        %v474 = vunpack.c.h.b16 %v385
        %v475 = vunpack.c.l.b16 %v386
        %v476 = vunpack.c.h.b16 %v386
        %v477 = vunpack.c.l.b16 %v387
        %v478 = vunpack.c.h.b16 %v387
        %v479 = vunpack.c.l.b16 %v388
        %v480 = vunpack.c.h.b16 %v388
        %v481 = vunpack.c.l.b16 %v389
        %v482 = vunpack.c.h.b16 %v389
        %v483 = vunpack.c.l.b16 %v390
        %v484 = vunpack.c.h.b16 %v390
        %v485 = vunpack.c.l.b16 %v391
        %v486 = vunpack.c.h.b16 %v391
        %v487 = vunpack.c.l.b16 %v392
        %v488 = vunpack.c.h.b16 %v392
        %v489 = vpack.c.b16 %v429, %v425
        %v490 = vpack.c.b16 %v430, %v426
        %v491 = vpack.c.b16 %v431, %v427
        %v492 = vpack.c.b16 %v432, %v428
        %v493 = vpack.c.b16 %v437, %v433
        %v494 = vpack.c.b16 %v438, %v434
        %v495 = vpack.c.b16 %v439, %v435
        %v496 = vpack.c.b16 %v440, %v436
        %v497 = vpack.c.b16 %v445, %v441
        %v498 = vpack.c.b16 %v446, %v442
        %v499 = vpack.c.b16 %v447, %v443
        %v500 = vpack.c.b16 %v448, %v444
        %v501 = vpack.c.b16 %v453, %v449
        %v502 = vpack.c.b16 %v454, %v450
        %v503 = vpack.c.b16 %v455, %v451
        %v504 = vpack.c.b16 %v456, %v452
        %v505 = vpack.c.b16 %v461, %v457
        %v506 = vpack.c.b16 %v462, %v458
        %v507 = vpack.c.b16 %v463, %v459
        %v508 = vpack.c.b16 %v464, %v460
        %v509 = vpack.c.b16 %v469, %v465
        %v510 = vpack.c.b16 %v470, %v466
        %v511 = vpack.c.b16 %v471, %v467
        %v512 = vpack.c.b16 %v472, %v468
        %v513 = vpack.c.b16 %v477, %v473
        %v514 = vpack.c.b16 %v478, %v474
        %v515 = vpack.c.b16 %v479, %v475
        %v516 = vpack.c.b16 %v480, %v476
        %v517 = vpack.c.b16 %v485, %v481
        %v518 = vpack.c.b16 %v486, %v482
        %v519 = vpack.c.b16 %v487, %v483
        %v520 = vpack.c.b16 %v488, %v484
        %553 = vmatpush.bf16.msra.mxu0 %v517
        %554 = vmatpush.bf16.msra.mxu0 %v513
        %555 = vmatpush.bf16.msra.mxu0 %v509
        %556 = vmatpush.bf16.msra.mxu0 %v505
        %557 = vmatpush.bf16.msra.mxu0 %v501
        %558 = vmatpush.bf16.msra.mxu0 %v497
        %559 = vmatpush.bf16.msra.mxu0 %v493
        %560 = vmatpush.bf16.msra.mxu0 %v489
        %561 = vmatmul.bf16.gmra.mxu0 %v360
        %v562 = vpop.f32.mrf.mxu0
        %v563 = vadd.f32 0.0, %v562
        %v564 = vpop.f32.mrf.mxu0
        %v565 = vadd.f32 0.0, %v564
        %566 = vdwg.mxu0
        %567 = vmatpush.bf16.msra.mxu0 %v518
        %568 = vmatpush.bf16.msra.mxu0 %v514
        %569 = vmatpush.bf16.msra.mxu0 %v510
        %570 = vmatpush.bf16.msra.mxu0 %v506
        %571 = vmatpush.bf16.msra.mxu0 %v502
        %572 = vmatpush.bf16.msra.mxu0 %v498
        %573 = vmatpush.bf16.msra.mxu0 %v494
        %574 = vmatpush.bf16.msra.mxu0 %v490
        %575 = vmatmul.bf16.gmra.mxu0 %v360
        %v576 = vpop.f32.mrf.mxu0
        %v577 = vadd.f32 0.0, %v576
        %v578 = vpop.f32.mrf.mxu0
        %v579 = vadd.f32 0.0, %v578
        %580 = vdwg.mxu0
        %581 = vmatpush.bf16.msra.mxu0 %v519
        %582 = vmatpush.bf16.msra.mxu0 %v515
        %583 = vmatpush.bf16.msra.mxu0 %v511
        %584 = vmatpush.bf16.msra.mxu0 %v507
        %585 = vmatpush.bf16.msra.mxu0 %v503
        %586 = vmatpush.bf16.msra.mxu0 %v499
        %587 = vmatpush.bf16.msra.mxu0 %v495
        %588 = vmatpush.bf16.msra.mxu0 %v491
        %589 = vmatmul.bf16.gmra.mxu0 %v360
        %v590 = vpop.f32.mrf.mxu0
        %v591 = vadd.f32 0.0, %v590
        %v592 = vpop.f32.mrf.mxu0
        %v593 = vadd.f32 0.0, %v592
        %594 = vdwg.mxu0
        %595 = vmatpush.bf16.msra.mxu0 %v520
        %596 = vmatpush.bf16.msra.mxu0 %v516
        %597 = vmatpush.bf16.msra.mxu0 %v512
        %598 = vmatpush.bf16.msra.mxu0 %v508
        %599 = vmatpush.bf16.msra.mxu0 %v504
        %600 = vmatpush.bf16.msra.mxu0 %v500
        %601 = vmatpush.bf16.msra.mxu0 %v496
        %602 = vmatpush.bf16.msra.mxu0 %v492
        %603 = vmatmul.bf16.gmra.mxu0 %v360
        %v604 = vpop.f32.mrf.mxu0
        %v605 = vadd.f32 0.0, %v604
        %v606 = vpop.f32.mrf.mxu0
        %v607 = vadd.f32 0.0, %v606
        %608 = vdwg.mxu0
        %v609 = vpack.c.bf16 %v577, %v563
        %v610 = vpack.c.bf16 %v605, %v591
        %v611 = vpack.c.bf16 %v579, %v565
        %v612 = vpack.c.bf16 %v607, %v593
        %v613 = vld [vmem:[#allocation7] sm:$0xf]
        %v615 = vperm.slane %v613, 0
        %v616 = vperm.slane %v613, 1
        %v617 = vperm.slane %v613, 2
        %v618 = vperm.slane %v613, 3
        %v623 = vpack.c.bf16 %v616, %v615
        %v624 = vpack.c.bf16 %v618, %v617
        %v627 = vunpack.c.l.b16 %v623
        %v628 = vunpack.c.h.b16 %v623
        %v629 = vunpack.c.l.b16 %v624
        %v630 = vunpack.c.h.b16 %v624
        %v631 = vpack.c.b16 %v627, %v627
        %v632 = vpack.c.b16 %v628, %v628
        %v633 = vpack.c.b16 %v629, %v629
        %v634 = vpack.c.b16 %v630, %v630
        %v636 = vpack.i.b16 %v631, %v631
        %v638 = vperm.slane %v636, 0
        %v640 = vpack.i.b16 %v632, %v632
        %v642 = vperm.slane %v640, 0
        %v644 = vpack.i.b16 %v633, %v633
        %v646 = vperm.slane %v644, 0
        %v648 = vpack.i.b16 %v634, %v634
        %v650 = vperm.slane %v648, 0
        %v651 = vunpack.c.l.bf16 %v609
        %v652 = vunpack.c.h.bf16 %v609
        %v653 = vunpack.c.l.bf16 %v610
        %v654 = vunpack.c.h.bf16 %v610
        %v655 = vunpack.c.l.bf16 %v611
        %v656 = vunpack.c.h.bf16 %v611
        %v657 = vunpack.c.l.bf16 %v612
        %v658 = vunpack.c.h.bf16 %v612
        %v659 = vunpack.c.l.bf16 %v638
        %v660 = vunpack.c.l.bf16 %v642
        %v661 = vunpack.c.l.bf16 %v646
        %v662 = vunpack.c.l.bf16 %v650
        %v663 = vadd.f32 %v651, %v659
        %v664 = vadd.f32 %v652, %v660
        %v665 = vadd.f32 %v653, %v661
        %v666 = vadd.f32 %v654, %v662
        %v667 = vadd.f32 %v655, %v659
        %v668 = vadd.f32 %v656, %v660
        %v669 = vadd.f32 %v657, %v661
        %v670 = vadd.f32 %v658, %v662
        %v671 = vpack.c.bf16 %v664, %v663
        %v672 = vpack.c.bf16 %v666, %v665
        %v673 = vpack.c.bf16 %v668, %v667
        %v674 = vpack.c.bf16 %v670, %v669
        %v675 = vxor.u32 %v671, 2147516416
        %v676 = vxor.u32 %v672, 2147516416
        %v677 = vxor.u32 %v673, 2147516416
        %v678 = vxor.u32 %v674, 2147516416
        %v679 = vunpack.c.l.bf16 %v675
        %v680 = vunpack.c.h.bf16 %v675
        %v681 = vunpack.c.l.bf16 %v676
        %v682 = vunpack.c.h.bf16 %v676
        %v683 = vunpack.c.l.bf16 %v677
        %v684 = vunpack.c.h.bf16 %v677
        %v685 = vunpack.c.l.bf16 %v678
        %v686 = vunpack.c.h.bf16 %v678
        %v687 = vmul.f32 %v679, 1.442695
        %v688 = vpow.pop %v687
        %v689 = vmul.f32 %v680, 1.442695
        %v690 = vpow.pop %v689
        %v691 = vmul.f32 %v681, 1.442695
        %v692 = vpow.pop %v691
        %v693 = vmul.f32 %v682, 1.442695
        %v694 = vpow.pop %v693
        %v695 = vmul.f32 %v683, 1.442695
        %v696 = vpow.pop %v695
        %v697 = vmul.f32 %v684, 1.442695
        %v698 = vpow.pop %v697
        %v699 = vmul.f32 %v685, 1.442695
        %v700 = vpow.pop %v699
        %v701 = vmul.f32 %v686, 1.442695
        %v702 = vpow.pop %v701
        %v703 = vpack.c.bf16 %v690, %v688
        %v704 = vpack.c.bf16 %v694, %v692
        %v705 = vpack.c.bf16 %v698, %v696
        %v706 = vpack.c.bf16 %v702, %v700
        %v707 = vunpack.c.l.bf16 %v703
        %v708 = vunpack.c.h.bf16 %v703
        %v709 = vunpack.c.l.bf16 %v704
        %v710 = vunpack.c.h.bf16 %v704
        %v711 = vunpack.c.l.bf16 %v705
        %v712 = vunpack.c.h.bf16 %v705
        %v713 = vunpack.c.l.bf16 %v706
        %v714 = vunpack.c.h.bf16 %v706
        %v715 = vadd.f32 %v707, 1.0
        %v716 = vadd.f32 %v708, 1.0
        %v717 = vadd.f32 %v709, 1.0
        %v718 = vadd.f32 %v710, 1.0
        %v719 = vadd.f32 %v711, 1.0
        %v720 = vadd.f32 %v712, 1.0
        %v721 = vadd.f32 %v713, 1.0
        %v722 = vadd.f32 %v714, 1.0
        %v723 = vpack.c.bf16 %v716, %v715
        %v724 = vpack.c.bf16 %v718, %v717
        %v725 = vpack.c.bf16 %v720, %v719
        %v726 = vpack.c.bf16 %v722, %v721
        %v727 = vunpack.c.h.bf16 1065369472
        %v728 = vunpack.c.l.bf16 1065369472
        %v729 = vunpack.c.h.bf16 %v723
        %v730 = vunpack.c.l.bf16 %v723
        %v731 = vrcp.pop %v729
        %v732 = vmul.f32 %v727, %v731
        %v733 = vrcp.pop %v730
        %v734 = vmul.f32 %v728, %v733
        %v735 = vpack.c.bf16 %v732, %v734
        %v736 = vunpack.c.h.bf16 %v724
        %v737 = vunpack.c.l.bf16 %v724
        %v738 = vrcp.pop %v736
        %v739 = vmul.f32 %v727, %v738
        %v740 = vrcp.pop %v737
        %v741 = vmul.f32 %v728, %v740
        %v742 = vpack.c.bf16 %v739, %v741
        %v743 = vunpack.c.h.bf16 %v725
        %v744 = vunpack.c.l.bf16 %v725
        %v745 = vrcp.pop %v743
        %v746 = vmul.f32 %v727, %v745
        %v747 = vrcp.pop %v744
        %v748 = vmul.f32 %v728, %v747
        %v749 = vpack.c.bf16 %v746, %v748
        %v750 = vunpack.c.h.bf16 %v726
        %v751 = vunpack.c.l.bf16 %v726
        %v752 = vrcp.pop %v750
        %v753 = vmul.f32 %v727, %v752
        %v754 = vrcp.pop %v751
        %v755 = vmul.f32 %v728, %v754
        %v756 = vpack.c.bf16 %v753, %v755
        %v757 = vunpack.c.l.bf16 %v671
        %v758 = vunpack.c.h.bf16 %v671
        %v759 = vunpack.c.l.bf16 %v672
        %v760 = vunpack.c.h.bf16 %v672
        %v761 = vunpack.c.l.bf16 %v673
        %v762 = vunpack.c.h.bf16 %v673
        %v763 = vunpack.c.l.bf16 %v674
        %v764 = vunpack.c.h.bf16 %v674
        %v765 = vunpack.c.l.bf16 %v735
        %v766 = vunpack.c.h.bf16 %v735
        %v767 = vunpack.c.l.bf16 %v742
        %v768 = vunpack.c.h.bf16 %v742
        %v769 = vunpack.c.l.bf16 %v749
        %v770 = vunpack.c.h.bf16 %v749
        %v771 = vunpack.c.l.bf16 %v756
        %v772 = vunpack.c.h.bf16 %v756
        %v773 = vmul.f32 %v757, %v765
        %v774 = vmul.f32 %v758, %v766
        %v775 = vmul.f32 %v759, %v767
        %v776 = vmul.f32 %v760, %v768
        %v777 = vmul.f32 %v761, %v769
        %v778 = vmul.f32 %v762, %v770
        %v779 = vmul.f32 %v763, %v771
        %v780 = vmul.f32 %v764, %v772
        %v781 = vpack.c.bf16 %v777, %v773
        %v782 = vpack.c.bf16 %v778, %v774
        %v783 = vpack.c.bf16 %v779, %v775
        %v784 = vpack.c.bf16 %v780, %v776
        %v785 = vld [vmem:[#allocation8] sm:$0xf]
        %v786 = vld [vmem:[#allocation8 + $0x4] sm:$0xf]
        %v787 = vld [vmem:[#allocation8 + $0x8] sm:$0xf]
        %v788 = vld [vmem:[#allocation8 + $0xc] sm:$0xf]
        %v789 = vld [vmem:[#allocation8 + $0x10] sm:$0xf]
        %v790 = vld [vmem:[#allocation8 + $0x14] sm:$0xf]
        %v791 = vld [vmem:[#allocation8 + $0x18] sm:$0xf]
        %v792 = vld [vmem:[#allocation8 + $0x1c] sm:$0xf]
        %v793 = vld [vmem:[#allocation8 + $0x20] sm:$0xf]
        %v794 = vld [vmem:[#allocation8 + $0x24] sm:$0xf]
        %v795 = vld [vmem:[#allocation8 + $0x28] sm:$0xf]
        %v796 = vld [vmem:[#allocation8 + $0x2c] sm:$0xf]
        %v797 = vld [vmem:[#allocation8 + $0x30] sm:$0xf]
        %v798 = vld [vmem:[#allocation8 + $0x34] sm:$0xf]
        %v799 = vld [vmem:[#allocation8 + $0x38] sm:$0xf]
        %v800 = vld [vmem:[#allocation8 + $0x3c] sm:$0xf]
        %v801 = vld [vmem:[#allocation8 + $0x40] sm:$0xf]
        %v802 = vld [vmem:[#allocation8 + $0x44] sm:$0xf]
        %v803 = vld [vmem:[#allocation8 + $0x48] sm:$0xf]
        %v804 = vld [vmem:[#allocation8 + $0x4c] sm:$0xf]
        %v805 = vld [vmem:[#allocation8 + $0x50] sm:$0xf]
        %v806 = vld [vmem:[#allocation8 + $0x54] sm:$0xf]
        %v807 = vld [vmem:[#allocation8 + $0x58] sm:$0xf]
        %v808 = vld [vmem:[#allocation8 + $0x5c] sm:$0xf]
        %v809 = vld [vmem:[#allocation8 + $0x60] sm:$0xf]
        %v810 = vld [vmem:[#allocation8 + $0x64] sm:$0xf]
        %v811 = vld [vmem:[#allocation8 + $0x68] sm:$0xf]
        %v812 = vld [vmem:[#allocation8 + $0x6c] sm:$0xf]
        %v813 = vld [vmem:[#allocation8 + $0x70] sm:$0xf]
        %v814 = vld [vmem:[#allocation8 + $0x74] sm:$0xf]
        %v815 = vld [vmem:[#allocation8 + $0x78] sm:$0xf]
        %v816 = vld [vmem:[#allocation8 + $0x7c] sm:$0xf]
        %v817 = vld [vmem:[#allocation8 + $0x80] sm:$0xf]
        %v818 = vld [vmem:[#allocation8 + $0x84] sm:$0xf]
        %v819 = vld [vmem:[#allocation8 + $0x88] sm:$0xf]
        %v820 = vld [vmem:[#allocation8 + $0x8c] sm:$0xf]
        %v821 = vld [vmem:[#allocation8 + $0x90] sm:$0xf]
        %v822 = vld [vmem:[#allocation8 + $0x94] sm:$0xf]
        %v823 = vld [vmem:[#allocation8 + $0x98] sm:$0xf]
        %v824 = vld [vmem:[#allocation8 + $0x9c] sm:$0xf]
        %v825 = vld [vmem:[#allocation8 + $0xa0] sm:$0xf]
        %v826 = vld [vmem:[#allocation8 + $0xa4] sm:$0xf]
        %v827 = vld [vmem:[#allocation8 + $0xa8] sm:$0xf]
        %v828 = vld [vmem:[#allocation8 + $0xac] sm:$0xf]
        %v829 = vld [vmem:[#allocation8 + $0xb0] sm:$0xf]
        %v830 = vld [vmem:[#allocation8 + $0xb4] sm:$0xf]
        %v831 = vld [vmem:[#allocation8 + $0xb8] sm:$0xf]
        %v832 = vld [vmem:[#allocation8 + $0xbc] sm:$0xf]
        %v833 = vld [vmem:[#allocation8 + $0xc0] sm:$0xf]
        %v834 = vld [vmem:[#allocation8 + $0xc4] sm:$0xf]
        %v835 = vld [vmem:[#allocation8 + $0xc8] sm:$0xf]
        %v836 = vld [vmem:[#allocation8 + $0xcc] sm:$0xf]
        %v837 = vld [vmem:[#allocation8 + $0xd0] sm:$0xf]
        %v838 = vld [vmem:[#allocation8 + $0xd4] sm:$0xf]
        %v839 = vld [vmem:[#allocation8 + $0xd8] sm:$0xf]
        %v840 = vld [vmem:[#allocation8 + $0xdc] sm:$0xf]
        %v841 = vld [vmem:[#allocation8 + $0xe0] sm:$0xf]
        %v842 = vld [vmem:[#allocation8 + $0xe4] sm:$0xf]
        %v843 = vld [vmem:[#allocation8 + $0xe8] sm:$0xf]
        %v844 = vld [vmem:[#allocation8 + $0xec] sm:$0xf]
        %v845 = vld [vmem:[#allocation8 + $0xf0] sm:$0xf]
        %v846 = vld [vmem:[#allocation8 + $0xf4] sm:$0xf]
        %v847 = vld [vmem:[#allocation8 + $0xf8] sm:$0xf]
        %v848 = vld [vmem:[#allocation8 + $0xfc] sm:$0xf]
        %v849 = vld [vmem:[%s4] sm:$0x1]
        %v851 = vperm.slane %v849, 0
        %v917 = vunpack.c.l.b16 %v785
        %v918 = vunpack.c.l.b16 %v786
        %v919 = vunpack.c.l.b16 %v787
        %v920 = vunpack.c.l.b16 %v788
        %v921 = vunpack.c.l.b16 %v789
        %v922 = vunpack.c.l.b16 %v790
        %v923 = vunpack.c.l.b16 %v791
        %v924 = vunpack.c.l.b16 %v792
        %v925 = vunpack.c.l.b16 %v793
        %v926 = vunpack.c.l.b16 %v794
        %v927 = vunpack.c.l.b16 %v795
        %v928 = vunpack.c.l.b16 %v796
        %v929 = vunpack.c.l.b16 %v797
        %v930 = vunpack.c.l.b16 %v798
        %v931 = vunpack.c.l.b16 %v799
        %v932 = vunpack.c.l.b16 %v800
        %v933 = vunpack.c.l.b16 %v801
        %v934 = vunpack.c.l.b16 %v802
        %v935 = vunpack.c.l.b16 %v803
        %v936 = vunpack.c.l.b16 %v804
        %v937 = vunpack.c.l.b16 %v805
        %v938 = vunpack.c.l.b16 %v806
        %v939 = vunpack.c.l.b16 %v807
        %v940 = vunpack.c.l.b16 %v808
        %v941 = vunpack.c.l.b16 %v809
        %v942 = vunpack.c.l.b16 %v810
        %v943 = vunpack.c.l.b16 %v811
        %v944 = vunpack.c.l.b16 %v812
        %v945 = vunpack.c.l.b16 %v813
        %v946 = vunpack.c.l.b16 %v814
        %v947 = vunpack.c.l.b16 %v815
        %v948 = vunpack.c.l.b16 %v816
        %v949 = vunpack.c.l.b16 %v817
        %v950 = vunpack.c.l.b16 %v818
        %v951 = vunpack.c.l.b16 %v819
        %v952 = vunpack.c.l.b16 %v820
        %v953 = vunpack.c.l.b16 %v821
        %v954 = vunpack.c.l.b16 %v822
        %v955 = vunpack.c.l.b16 %v823
        %v956 = vunpack.c.l.b16 %v824
        %v957 = vunpack.c.l.b16 %v825
        %v958 = vunpack.c.l.b16 %v826
        %v959 = vunpack.c.l.b16 %v827
        %v960 = vunpack.c.l.b16 %v828
        %v961 = vunpack.c.l.b16 %v829
        %v962 = vunpack.c.l.b16 %v830
        %v963 = vunpack.c.l.b16 %v831
        %v964 = vunpack.c.l.b16 %v832
        %v965 = vunpack.c.l.b16 %v833
        %v966 = vunpack.c.l.b16 %v834
        %v967 = vunpack.c.l.b16 %v835
        %v968 = vunpack.c.l.b16 %v836
        %v969 = vunpack.c.l.b16 %v837
        %v970 = vunpack.c.l.b16 %v838
        %v971 = vunpack.c.l.b16 %v839
        %v972 = vunpack.c.l.b16 %v840
        %v973 = vunpack.c.l.b16 %v841
        %v974 = vunpack.c.l.b16 %v842
        %v975 = vunpack.c.l.b16 %v843
        %v976 = vunpack.c.l.b16 %v844
        %v977 = vunpack.c.l.b16 %v845
        %v978 = vunpack.c.l.b16 %v846
        %v979 = vunpack.c.l.b16 %v847
        %v980 = vunpack.c.l.b16 %v848
        %v981 = vpack.c.b16 %v918, %v917
        %v982 = vpack.c.b16 %v920, %v919
        %v983 = vpack.c.b16 %v922, %v921
        %v984 = vpack.c.b16 %v924, %v923
        %v985 = vpack.c.b16 %v926, %v925
        %v986 = vpack.c.b16 %v928, %v927
        %v987 = vpack.c.b16 %v930, %v929
        %v988 = vpack.c.b16 %v932, %v931
        %v989 = vpack.c.b16 %v934, %v933
        %v990 = vpack.c.b16 %v936, %v935
        %v991 = vpack.c.b16 %v938, %v937
        %v992 = vpack.c.b16 %v940, %v939
        %v993 = vpack.c.b16 %v942, %v941
        %v994 = vpack.c.b16 %v944, %v943
        %v995 = vpack.c.b16 %v946, %v945
        %v996 = vpack.c.b16 %v948, %v947
        %v997 = vpack.c.b16 %v950, %v949
        %v998 = vpack.c.b16 %v952, %v951
        %v999 = vpack.c.b16 %v954, %v953
        %v1000 = vpack.c.b16 %v956, %v955
        %v1001 = vpack.c.b16 %v958, %v957
        %v1002 = vpack.c.b16 %v960, %v959
        %v1003 = vpack.c.b16 %v962, %v961
        %v1004 = vpack.c.b16 %v964, %v963
        %v1005 = vpack.c.b16 %v966, %v965
        %v1006 = vpack.c.b16 %v968, %v967
        %v1007 = vpack.c.b16 %v970, %v969
        %v1008 = vpack.c.b16 %v972, %v971
        %v1009 = vpack.c.b16 %v974, %v973
        %v1010 = vpack.c.b16 %v976, %v975
        %v1011 = vpack.c.b16 %v978, %v977
        %v1012 = vpack.c.b16 %v980, %v979
        %1045 = vmatpush.bf16.msra.mxu0 %v988
        %1046 = vmatpush.bf16.msra.mxu0 %v987
        %1047 = vmatpush.bf16.msra.mxu0 %v986
        %1048 = vmatpush.bf16.msra.mxu0 %v985
        %1049 = vmatpush.bf16.msra.mxu0 %v984
        %1050 = vmatpush.bf16.msra.mxu0 %v983
        %1051 = vmatpush.bf16.msra.mxu0 %v982
        %1052 = vmatpush.bf16.msra.mxu0 %v981
        %1053 = vmatmul.bf16.gmra.mxu0 %v781
        %v1054 = vpop.f32.mrf.mxu0
        %v1055 = vadd.f32 %v851, %v1054
        %v1056 = vpop.f32.mrf.mxu0
        %v1057 = vadd.f32 %v851, %v1056
        %1058 = vdwg.mxu0
        %1059 = vmatpush.bf16.msra.mxu0 %v996
        %1060 = vmatpush.bf16.msra.mxu0 %v995
        %1061 = vmatpush.bf16.msra.mxu0 %v994
        %1062 = vmatpush.bf16.msra.mxu0 %v993
        %1063 = vmatpush.bf16.msra.mxu0 %v992
        %1064 = vmatpush.bf16.msra.mxu0 %v991
        %1065 = vmatpush.bf16.msra.mxu0 %v990
        %1066 = vmatpush.bf16.msra.mxu0 %v989
        %1067 = vmatmul.bf16.gmra.mxu0 %v782
        %v1068 = vpop.f32.mrf.mxu0
        %v1069 = vadd.f32 %v1055, %v1068
        %v1070 = vpop.f32.mrf.mxu0
        %v1071 = vadd.f32 %v1057, %v1070
        %1072 = vdwg.mxu0
        %1073 = vmatpush.bf16.msra.mxu0 %v1004
        %1074 = vmatpush.bf16.msra.mxu0 %v1003
        %1075 = vmatpush.bf16.msra.mxu0 %v1002
        %1076 = vmatpush.bf16.msra.mxu0 %v1001
        %1077 = vmatpush.bf16.msra.mxu0 %v1000
        %1078 = vmatpush.bf16.msra.mxu0 %v999
        %1079 = vmatpush.bf16.msra.mxu0 %v998
        %1080 = vmatpush.bf16.msra.mxu0 %v997
        %1081 = vmatmul.bf16.gmra.mxu0 %v783
        %v1082 = vpop.f32.mrf.mxu0
        %v1083 = vadd.f32 %v1069, %v1082
        %v1084 = vpop.f32.mrf.mxu0
        %v1085 = vadd.f32 %v1071, %v1084
        %1086 = vdwg.mxu0
        %1087 = vmatpush.bf16.msra.mxu0 %v1012
        %1088 = vmatpush.bf16.msra.mxu0 %v1011
        %1089 = vmatpush.bf16.msra.mxu0 %v1010
        %1090 = vmatpush.bf16.msra.mxu0 %v1009
        %1091 = vmatpush.bf16.msra.mxu0 %v1008
        %1092 = vmatpush.bf16.msra.mxu0 %v1007
        %1093 = vmatpush.bf16.msra.mxu0 %v1006
        %1094 = vmatpush.bf16.msra.mxu0 %v1005
        %1095 = vmatmul.bf16.gmra.mxu0 %v784
        %v1096 = vpop.f32.mrf.mxu0
        %v1097 = vadd.f32 %v1083, %v1096
        %v1098 = vpop.f32.mrf.mxu0
        %v1099 = vadd.f32 %v1085, %v1098
        %1100 = vdwg.mxu0
        %1101 = vst [vmem:[%s299] sm:$0xff] %v1097
        %1102 = vst [vmem:[%s299 + $0x8] sm:$0xff] %v1099
        %s1103 = sand.u32 %s142, 1
        %s1104 = scalar_lea.sflag [#allocation4], %s1103
        %s1105 = sand.u32 %s142, 1
        %s1106 = smul.addr %s1105, 16
        %s1107 = scalar_lea.vmem [#allocation10], %s1106
        // Predicated region
        $region57: #{tpu_custom_call.1} parent=39 // pred_check
          %p1108 = pneg %p152
        $region58: #{tpu_custom_call.1} parent=39 // pred_check_branch
          %1110 = sbr.rel (%p1108) target = $region60
        $region59: #{tpu_custom_call.1} parent=39 // pred_region
          %s1111 = smul.u32 2, %s24
          %s1112 = ssub.s32 3, %s1111
          %p1113 = scmp.lt.s32.totalorder %s1112, 2
          %s1114 = scalar_select %p1113, %s1112, 2
          %s1115 = smul.u32 8, %s1114
          %s1116 = ssub.s32 16, %s1115
          %s1117 = sshll.u32 %s1116, 4
          %1118 = vsyncadd %s1104, %s1117
          %p1119 = scmp.ne.s32.totalorder 0, %s1115
          %s1120 = smul.addr %s1111, 8
          %s1121 = scalar_lea.hbm %s5, %s1120
          %s1122 = smul.u32 8, %s1114
          %s1123 = sshll.u32 %s1107, 4
          %s1124 = int_to_ptr.vmem [resolvable:$true] %s1123
          %s1125 = sshll.u32 %s1121, 4
          %s1126 = int_to_ptr.hbm [resolvable:$true] %s1125
          %s1127 = sshll.u32 %s1122, 4
          %1131 = dma.vmem_to_hbm [thread:$0]  (%p1119), %s1124, %s1127, %s1126, %s1104, 128, 128, 8
        $region60: #{tpu_custom_call.1} parent=39 // pred_fallthru
          _
      $region40: #{tpu_custom_call.1} parent=5 // pred_fallthru
        _
      %p1132 = scmp.le.s32.totalorder 2, %s19
      // Predicated region
      $region61: #{tpu_custom_call.1} parent=5 // pred_check
        %p1133 = pneg %p1132
      $region62: #{tpu_custom_call.1} parent=5 // pred_check_branch
        %1135 = sbr.rel (%p1133) target = $region64
      $region63: #{tpu_custom_call.1} parent=5 // pred_region
        %s1136 = ssub.s32 %s19, 2
        // Predicated region
        $region65: #{tpu_custom_call.1} parent=63 // pred_check
          %p1137 = pneg %p158
        $region66: #{tpu_custom_call.1} parent=63 // pred_check_branch
          %1139 = sbr.rel (%p1137) target = $region68
        $region67: #{tpu_custom_call.1} parent=63 // pred_region
          %s1140 = sand.u32 %s143, 1
          %s1141 = scalar_lea.sflag [#allocation4], %s1140
          %s1142 = sand.u32 %s143, 1
          %s1143 = smul.addr %s1142, 16
          %s1144 = scalar_lea.vmem [#allocation10], %s1143
          %1146 = dma.done %s1141, 256
        $region68: #{tpu_custom_call.1} parent=63 // pred_fallthru
          _
      $region64: #{tpu_custom_call.1} parent=5 // pred_fallthru
        _
    $region6: #{tpu_custom_call.1} parent=1 // loop_footer
      %s23 = sadd.s32 1, %s19
    $region7: #{tpu_custom_call.1} parent=1 // loop_footer_branch
      %18 = sbr.rel target = $region3
    $region8: #{tpu_custom_call.1} parent=1 // loop_exit
      _
    %1147 = vsyncpa [#allocation3], 1
    %s1148 = scalar_lea.sflag [#allocation3], 1
    %1149 = vsyncpa %s1148, 1
    %1150 = vsyncpa [#allocation6], 1
    %1151 = vsyncpa [#allocation9], 1
    %1152 = vsyncpa [#allocation4], 1
    %s1153 = scalar_lea.sflag [#allocation4], 1
    %1154 = vsyncpa %s1153, 1

</llo_original>
